<compile_context>
chip_gen: v7x
topology: tpu7x:2x2x1
jax: 0.10.0
libtpu: 0.0.40
codegen_flags: <defaults>
</compile_context>

<pallas_src>
import functools

import jax
import jax.numpy as jnp
from jax.experimental import pallas as pl
from jax.experimental.pallas import tpu as pltpu


def _round_up(x, n):
    return ((x + n - 1) // n) * n


def _vmem_capacity_bytes():
    try:
        info = pltpu.get_tpu_info()
        cap = getattr(info, "vmem_capacity_bytes", None)
        if cap:
            return int(cap)
    except Exception:
        pass
    return 64 << 20  # conservative (v7x has 64 MiB / TC)


def _cosface_kernel(feat_ref, wt_ref, labels_ref, out_ref, wnorm_ref, *, s, m,
                    compute_dtype):
    # feat_ref:   (tb, F)  pre-L2-normalized feature rows (f32)
    # wt_ref:     (F, tc)  streamed transposed weight tile (f32 or bf16)
    # labels_ref: (tb, 1)  int32 labels (-1 / padded rows never match)
    # out_ref:    (tb, tc) scaled logits tile
    # wnorm_ref:  (F, tc)  VMEM scratch: normalized weight for this class tile
    tb, tc = out_ref.shape

    # The weight block index is constant across the inner batch axis, so the
    # tile is DMA'd once per class tile; normalize it once (batch step 0) and
    # reuse the scratch for every batch tile.
    @pl.when(pl.program_id(1) == 0)
    def _():
        wt = wt_ref[...].astype(jnp.float32)
        # clamp on ||w||^2 at 1e-24 == torch's 1e-12 clamp on ||w||
        w_sumsq = jnp.sum(wt * wt, axis=0, keepdims=True)          # (1, tc)
        wn = wt * jax.lax.rsqrt(jnp.maximum(w_sumsq, 1e-24))
        wnorm_ref[...] = wn.astype(wnorm_ref.dtype)

    # Cosine logits for this (batch-tile, class-tile): MXU matmul, f32 acc.
    f = feat_ref[...].astype(compute_dtype)
    logits = jnp.dot(f, wnorm_ref[...], preferred_element_type=jnp.float32)

    # Subtract margin m at (row, labels[row]).  Shift the labels by the class
    # tile offset (a (tb,1) op) instead of offsetting the full (tb,tc) iota.
    # labels == -1 (incl. padded rows) can never match a non-negative index.
    labels_local = labels_ref[...] - pl.program_id(0) * tc          # (tb, 1)
    cls_idx = jax.lax.broadcasted_iota(jnp.int32, (tb, tc), 1)
    logits = jnp.where(labels_local == cls_idx, logits - m, logits)

    out_ref[...] = (logits * s).astype(out_ref.dtype)


def cosface_forward(feature, w, labels, *, s=32.0, m=0.4, tc=1024, tb=256,
                    compute_dtype=jnp.float32, out_dtype=jnp.float32):
    """feature: [B, F], w: [C, F] (PyTorch param layout), labels: [B] -> [B, C] logits."""
    B, F = feature.shape
    C, F2 = w.shape
    assert F == F2

    w_bytes = jnp.dtype(compute_dtype).itemsize
    out_bytes = jnp.dtype(out_dtype).itemsize

    # ---- tile sizing (generation-aware VMEM budget) ----
    budget = max(_vmem_capacity_bytes() - (8 << 20), 24 << 20)
    tc = max(128, _round_up(min(tc, _round_up(C, 128)), 128))
    tb = max(8, _round_up(min(tb, _round_up(B, 8)), 8))

    def _est(tb_, tc_):
        return (2 * tb_ * F * 4              # feature double buffer (f32)
                + 2 * F * tc_ * w_bytes      # streamed weight double buffer
                + 2 * tb_ * tc_ * out_bytes  # output double buffer
                + 2 * tb_ * 128 * 4          # labels (lane-padded)
                + F * tc_ * w_bytes)         # normalized-weight scratch

    while _est(tb, tc) > budget and tc > 128:
        tc = max(128, _round_up(tc // 2, 128))
    while _est(tb, tc) > budget and tb > 8:
        tb = max(8, _round_up(tb // 2, 8))

    C_pad = _round_up(C, tc)
    B_pad = _round_up(B, tb)

    # ---- hoisted one-time work (XLA, outside the kernel) ----
    f32 = feature.astype(jnp.float32)
    f_norm = f32 * jax.lax.rsqrt(
        jnp.maximum(jnp.sum(f32 * f32, axis=-1, keepdims=True), 1e-24))
    labels_i32 = labels.astype(jnp.int32)
    if B_pad != B:
        f_norm = jnp.pad(f_norm, ((0, B_pad - B), (0, 0)))
        labels_i32 = jnp.pad(labels_i32, (0, B_pad - B), constant_values=-1)
    labels2d = labels_i32.reshape(B_pad, 1)

    # Transpose so the kernel RHS is lane-dense (class axis on lanes); cast the
    # streamed tensor to the compute dtype in the wrapper so the HBM stream is
    # actually narrower when compute_dtype=bf16.
    w_t = jnp.transpose(w).astype(jnp.float32)                      # (F, C)
    if C_pad != C:
        w_t = jnp.pad(w_t, ((0, 0), (0, C_pad - C)))
    if compute_dtype != jnp.float32:
        w_t = w_t.astype(compute_dtype)

    vmem_limit = int(min(budget, max(_est(tb, tc) + (16 << 20), 32 << 20)))

    kernel = functools.partial(_cosface_kernel, s=s, m=m,
                               compute_dtype=compute_dtype)
    out = pl.pallas_call(
        kernel,
        out_shape=jax.ShapeDtypeStruct((B_pad, C_pad), out_dtype),
        grid=(C_pad // tc, B_pad // tb),            # class OUTER, batch INNER
        in_specs=[
            pl.BlockSpec((tb, F), lambda j, i: (i, 0)),   # normalized features
            pl.BlockSpec((F, tc), lambda j, i: (0, j)),   # weight: one DMA / class tile
            pl.BlockSpec((tb, 1), lambda j, i: (i, 0)),   # labels
        ],
        out_specs=pl.BlockSpec((tb, tc), lambda j, i: (i, j)),
        scratch_shapes=[pltpu.VMEM((F, tc), compute_dtype)],
        compiler_params=pltpu.CompilerParams(
            # batch (inner) axis carries the normalized-weight scratch ->
            # must be "arbitrary"; class axis stays "parallel" (v7x 2 TCs).
            dimension_semantics=("parallel", "arbitrary"),
            vmem_limit_bytes=vmem_limit),
    )(f_norm, w_t, labels2d)

    return out[:B, :C]


def _reference(feature, w, labels, s=32.0, m=0.4):
    f = feature / jnp.maximum(
        jnp.linalg.norm(feature, axis=-1, keepdims=True), 1e-12)
    wn = w / jnp.maximum(jnp.linalg.norm(w, axis=-1, keepdims=True), 1e-12)
    logits = f @ wn.T
    cls_idx = jnp.arange(w.shape[0])[None, :]
    mask = (labels[:, None] == cls_idx) & (labels[:, None] != -1)
    logits = jnp.where(mask, logits - m, logits)
    return logits * s


if __name__ == "__main__":
    key = jax.random.PRNGKey(0)
    B, F, C = 16, 64, 1000        # non-multiple class count exercises padding
    k_feat, k_w, k_lab = jax.random.split(key, 3)

    feature = jax.random.normal(k_feat, (B, F), dtype=jnp.float32)
    # torch.rand(class_num, feature_num) -> uniform [0, 1)
    w = jax.random.uniform(k_w, (C, F), dtype=jnp.float32)
    labels = jax.random.randint(k_lab, (B,), 0, C, dtype=jnp.int32)
    labels = labels.at[1].set(-1).at[5].set(-1)   # some rows without margin

    ref = _reference(feature, w, labels, s=32.0, m=0.4)

    # default tiles: single class tile, single batch tile
    out = cosface_forward(feature, w, labels, s=32.0, m=0.4)
    out = jax.block_until_ready(out)
    assert out.shape == (B, C)
    assert jnp.allclose(out, ref, atol=1e-4, rtol=1e-4)

    # small tiles: exercises class tiling, padded classes, and the
    # scratch-cached normalized weight reused across inner batch steps
    out2 = cosface_forward(feature, w, labels, s=32.0, m=0.4, tc=128, tb=8)
    out2 = jax.block_until_ready(out2)
    assert jnp.allclose(out2, ref, atol=1e-4, rtol=1e-4)

    # bf16 streamed-weight path (looser tolerance: bf16 inputs, f32 accumulate)
    out3 = cosface_forward(feature, w, labels, s=32.0, m=0.4, tc=128, tb=8,
                           compute_dtype=jnp.bfloat16)
    out3 = jax.block_until_ready(out3)
    assert jnp.allclose(out3, ref, atol=0.5, rtol=0.05)

    print("KERNEL_OK")
</pallas_src>

<mosaic_0001>
module attributes {stable_mosaic.version = 11 : i64} {
  func.func @_cosface_kernel(%arg0: i32, %arg1: i32, %arg2: memref<16x64xf32, #tpu.memory_space<vmem>>, %arg3: memref<64x1024xf32, #tpu.memory_space<vmem>>, %arg4: memref<16x1xi32, #tpu.memory_space<vmem>>, %arg5: memref<16x1024xf32, #tpu.memory_space<vmem>>, %arg6: memref<64x1024xf32, #tpu.memory_space<vmem>>) attributes {dimension_semantics = [#tpu.dimension_semantics<parallel>, #tpu.dimension_semantics<arbitrary>], iteration_bounds = array<i64: 1, 1>, scalar_prefetch = 0 : i64, scratch_operands = 1 : i64, tpu.core_type = #tpu.core_type<tc>, window_params = [{transform_indices = @transform_0, window_bounds = array<i64: 16, 64>}, {transform_indices = @transform_1, window_bounds = array<i64: 64, 1024>}, {transform_indices = @transform_2, window_bounds = array<i64: 16, 1>}, {transform_indices = @transform_3, window_bounds = array<i64: 16, 1024>}]} {
    %c0_i32 = arith.constant 0 : i32
    %0 = arith.cmpi eq, %arg1, %c0_i32 : i32
    %1 = arith.extui %0 : i1 to i32
    %c0_i32_0 = arith.constant 0 : i32
    %2 = arith.cmpi ne, %1, %c0_i32_0 : i32
    scf.if %2 {
      %c0_10 = arith.constant 0 : index
      %c0_11 = arith.constant 0 : index
      %19 = vector.load %arg3[%c0_10, %c0_11] : memref<64x1024xf32, #tpu.memory_space<vmem>>, vector<64x1024xf32>
      %20 = arith.mulf %19, %19 : vector<64x1024xf32>
      %cst_12 = arith.constant dense<0.000000e+00> : vector<1024xf32>
      %21 = vector.multi_reduction <add>, %20, %cst_12 [0] : vector<64x1024xf32> to vector<1024xf32>
      %22 = vector.shape_cast %21 : vector<1024xf32> to vector<1x1024xf32>
      %cst_13 = arith.constant 1.000000e-24 : f32
      %23 = vector.broadcast %cst_13 : f32 to vector<1x1024xf32>
      %24 = arith.maximumf %22, %23 : vector<1x1024xf32>
      %25 = math.rsqrt %24 : vector<1x1024xf32>
      %26 = vector.broadcast %25 : vector<1x1024xf32> to vector<64x1024xf32>
      %27 = arith.mulf %19, %26 : vector<64x1024xf32>
      %c0_14 = arith.constant 0 : index
      %c0_15 = arith.constant 0 : index
      %28 = vector.load %arg6[%c0_14, %c0_15] : memref<64x1024xf32, #tpu.memory_space<vmem>>, vector<64x1024xf32>
      tpu.vector_store %arg6[%c0_14, %c0_15], %27 {strides = array<i32>} : memref<64x1024xf32, #tpu.memory_space<vmem>>, vector<64x1024xf32>,
    } else {
    }
    %c0 = arith.constant 0 : index
    %c0_1 = arith.constant 0 : index
    %3 = vector.load %arg2[%c0, %c0_1] : memref<16x64xf32, #tpu.memory_space<vmem>>, vector<16x64xf32>
    %c0_2 = arith.constant 0 : index
    %c0_3 = arith.constant 0 : index
    %4 = vector.load %arg6[%c0_2, %c0_3] : memref<64x1024xf32, #tpu.memory_space<vmem>>, vector<64x1024xf32>
    %cst = arith.constant dense<0.000000e+00> : vector<16x1024xf32>
    %5 = tpu.matmul %3, %4, %cst {dimension_numbers = #tpu.dot_dimension_numbers<[1], [0], [0], [1], [0, 0, 1, 1], [], []>} : vector<16x64xf32>, vector<64x1024xf32>, vector<16x1024xf32> -> vector<16x1024xf32>
    %c0_4 = arith.constant 0 : index
    %c0_5 = arith.constant 0 : index
    %6 = vector.load %arg4[%c0_4, %c0_5] : memref<16x1xi32, #tpu.memory_space<vmem>>, vector<16x1xi32>
    %c1024_i32 = arith.constant 1024 : i32
    %7 = arith.muli %arg0, %c1024_i32 : i32
    %8 = vector.broadcast %7 : i32 to vector<16x1xi32>
    %9 = arith.subi %6, %8 : vector<16x1xi32>
    %10 = tpu.iota {dimensions = array<i32: 1>} : vector<16x1024xi32>
    %11 = vector.broadcast %9 : vector<16x1xi32> to vector<16x1024xi32>
    %12 = arith.cmpi eq, %11, %10 : vector<16x1024xi32>
    %cst_6 = arith.constant 4.000000e-01 : f32
    %13 = vector.broadcast %cst_6 : f32 to vector<16x1024xf32>
    %14 = arith.subf %5, %13 : vector<16x1024xf32>
    %15 = arith.select %12, %14, %5 : vector<16x1024xi1>, vector<16x1024xf32>
    %cst_7 = arith.constant 3.200000e+01 : f32
    %16 = vector.broadcast %cst_7 : f32 to vector<16x1024xf32>
    %17 = arith.mulf %15, %16 : vector<16x1024xf32>
    %c0_8 = arith.constant 0 : index
    %c0_9 = arith.constant 0 : index
    %18 = vector.load %arg5[%c0_8, %c0_9] : memref<16x1024xf32, #tpu.memory_space<vmem>>, vector<16x1024xf32>
    tpu.vector_store %arg5[%c0_8, %c0_9], %17 {strides = array<i32>} : memref<16x1024xf32, #tpu.memory_space<vmem>>, vector<16x1024xf32>,
    return
  }
  func.func @transform_0(%arg0: i32, %arg1: i32) -> (i32, i32) {
    %c0_i32 = arith.constant 0 : i32
    %c0_i32_0 = arith.constant 0 : i32
    return %arg1, %c0_i32 : i32, i32
  }
  func.func @transform_1(%arg0: i32, %arg1: i32) -> (i32, i32) {
    %c0_i32 = arith.constant 0 : i32
    %c0_i32_0 = arith.constant 0 : i32
    return %c0_i32, %arg0 : i32, i32
  }
  func.func @transform_2(%arg0: i32, %arg1: i32) -> (i32, i32) {
    %c0_i32 = arith.constant 0 : i32
    %c0_i32_0 = arith.constant 0 : i32
    return %arg1, %c0_i32 : i32, i32
  }
  func.func @transform_3(%arg0: i32, %arg1: i32) -> (i32, i32) {
    %c0_i32 = arith.constant 0 : i32
    return %arg1, %arg0 : i32, i32
  }
}

</mosaic_0001>

<llo_original>
// kernel: tpu_custom_call.1
$region0: #{tpu_custom_call.1}
  #allocation0 [shape = 'u32[]', space=smem, size = 0x4, offset = 0x4, fixed_abs, tag = 'smem constant byte address 0x4 - core index']
  #allocation1 [shape = 'u32[144,128]{1,0:T(1,128)}', space=vmem, size = 0x12000, scoped, tag = 'internal scratch']
  #allocation2 [shape = 'f32[64,1024]{1,0:T(8,128)}', space=vmem, size = 0x40000, scoped, tag = 'scratch operand']
  %s0 = inlined_call_operand.vmem [shape: f32[16,64], index: 0, kind: input, shape index: {}]
  %s1 = inlined_call_operand.hbm [shape: f32[64,1024], index: 1, kind: input, shape index: {}]
  %s2 = inlined_call_operand.vmem [shape: s32[16,1], index: 2, kind: input, shape index: {}]
  %s3 = inlined_call_operand.hbm [shape: f32[16,1024], index: 3, kind: output, shape index: {}]
  %s4 = sld [smem:[#allocation0]]
  $region30: #{tpu_custom_call.1} parent=0
    _
  %s6 = ssub.s32 1, %s4
  %s7 = scalar_select 0, %s6, %s4
  $region1: #{tpu_custom_call.1} parent=0
    #allocation3 [shape = 'u8[262144]{0}', space=vmem, size = 0x40000, scoped, tag = 'input window, operand 1, single buffered']
    #allocation4 [shape = 's32[1]{0}', space=sflag, size = 0x4, scoped, tag = 'scoped memory for tpu_custom_call.1']
    #allocation5 [shape = 's32[1]{0}', space=sflag, size = 0x4, scoped, tag = 'scoped memory for tpu_custom_call.1']
    #allocation6 [shape = 'u8[65536]{0}', space=vmem, size = 0x10000, scoped, tag = 'output window, operand 0, single buffered']
    %8 = vsyncpa [#allocation4], 0
    %9 = vsyncpa [#allocation5], 0
    // Predicated region
    $region2: #{tpu_custom_call.1} parent=1 // pred_check
      _
    $region3: #{tpu_custom_call.1} parent=1 // pred_check_branch
      %11 = sbr.rel (0) target = $region5
    $region4: #{tpu_custom_call.1} parent=1 // pred_region
      _
    $region5: #{tpu_custom_call.1} parent=1 // pred_fallthru
      _
    // Predicated region
    $region6: #{tpu_custom_call.1} parent=1 // pred_check
      _
    $region7: #{tpu_custom_call.1} parent=1 // pred_check_branch
      %13 = sbr.rel (0) target = $region9
    $region8: #{tpu_custom_call.1} parent=1 // pred_region
      %s15 = ssub.s32 8192, 8192
      %16 = vsyncadd [#allocation4], %s15
      %s17 = sshll.u32 [#allocation3], 4
      %s18 = int_to_ptr.vmem [resolvable:$true] %s17
      %23 = dma.hbm_to_vmem [thread:$0]  %s1, 8192, %s18, [#allocation4], 1024, 1024, 64
    $region9: #{tpu_custom_call.1} parent=1 // pred_fallthru
      _
    // Predicated region
    $region10: #{tpu_custom_call.1} parent=1 // pred_check
      _
    $region11: #{tpu_custom_call.1} parent=1 // pred_check_branch
      %25 = sbr.rel (0) target = $region13
    $region12: #{tpu_custom_call.1} parent=1 // pred_region
      _
    $region13: #{tpu_custom_call.1} parent=1 // pred_fallthru
      _
    // Predicated region
    $region14: #{tpu_custom_call.1} parent=1 // pred_check
      _
    $region15: #{tpu_custom_call.1} parent=1 // pred_check_branch
      %27 = sbr.rel (0) target = $region17
    $region16: #{tpu_custom_call.1} parent=1 // pred_region
      %28 = dma.done [#allocation4], 8192
    $region17: #{tpu_custom_call.1} parent=1 // pred_fallthru
      _
    %p29 = scmp.eq.s32.totalorder 0, 0
    // Predicated region
    $region18: #{tpu_custom_call.1} parent=1 // pred_check
      %p30 = pneg %p29
    $region19: #{tpu_custom_call.1} parent=1 // pred_check_branch
      %32 = sbr.rel (%p30) target = $region21
    $region20: #{tpu_custom_call.1} parent=1 // pred_region
      %v33 = vld [vmem:[#allocation3] sm:$0xff]
      %v34 = vld [vmem:[#allocation3 + $0x8] sm:$0xff]
      %v35 = vld [vmem:[#allocation3 + $0x10] sm:$0xff]
      %v36 = vld [vmem:[#allocation3 + $0x18] sm:$0xff]
      %v37 = vld [vmem:[#allocation3 + $0x20] sm:$0xff]
      %v38 = vld [vmem:[#allocation3 + $0x28] sm:$0xff]
      %v39 = vld [vmem:[#allocation3 + $0x30] sm:$0xff]
      %v40 = vld [vmem:[#allocation3 + $0x38] sm:$0xff]
      %v41 = vld [vmem:[#allocation3 + $0x40] sm:$0xff]
      %v42 = vld [vmem:[#allocation3 + $0x48] sm:$0xff]
      %v43 = vld [vmem:[#allocation3 + $0x50] sm:$0xff]
      %v44 = vld [vmem:[#allocation3 + $0x58] sm:$0xff]
      %v45 = vld [vmem:[#allocation3 + $0x60] sm:$0xff]
      %v46 = vld [vmem:[#allocation3 + $0x68] sm:$0xff]
      %v47 = vld [vmem:[#allocation3 + $0x70] sm:$0xff]
      %v48 = vld [vmem:[#allocation3 + $0x78] sm:$0xff]
      %v49 = vld [vmem:[#allocation3 + $0x80] sm:$0xff]
      %v50 = vld [vmem:[#allocation3 + $0x88] sm:$0xff]
      %v51 = vld [vmem:[#allocation3 + $0x90] sm:$0xff]
      %v52 = vld [vmem:[#allocation3 + $0x98] sm:$0xff]
      %v53 = vld [vmem:[#allocation3 + $0xa0] sm:$0xff]
      %v54 = vld [vmem:[#allocation3 + $0xa8] sm:$0xff]
      %v55 = vld [vmem:[#allocation3 + $0xb0] sm:$0xff]
      %v56 = vld [vmem:[#allocation3 + $0xb8] sm:$0xff]
      %v57 = vld [vmem:[#allocation3 + $0xc0] sm:$0xff]
      %v58 = vld [vmem:[#allocation3 + $0xc8] sm:$0xff]
      %v59 = vld [vmem:[#allocation3 + $0xd0] sm:$0xff]
      %v60 = vld [vmem:[#allocation3 + $0xd8] sm:$0xff]
      %v61 = vld [vmem:[#allocation3 + $0xe0] sm:$0xff]
      %v62 = vld [vmem:[#allocation3 + $0xe8] sm:$0xff]
      %v63 = vld [vmem:[#allocation3 + $0xf0] sm:$0xff]
      %v64 = vld [vmem:[#allocation3 + $0xf8] sm:$0xff]
      %v65 = vld [vmem:[#allocation3 + $0x100] sm:$0xff]
      %v66 = vld [vmem:[#allocation3 + $0x108] sm:$0xff]
      %v67 = vld [vmem:[#allocation3 + $0x110] sm:$0xff]
      %v68 = vld [vmem:[#allocation3 + $0x118] sm:$0xff]
      %v69 = vld [vmem:[#allocation3 + $0x120] sm:$0xff]
      %v70 = vld [vmem:[#allocation3 + $0x128] sm:$0xff]
      %v71 = vld [vmem:[#allocation3 + $0x130] sm:$0xff]
      %v72 = vld [vmem:[#allocation3 + $0x138] sm:$0xff]
      %v73 = vld [vmem:[#allocation3 + $0x140] sm:$0xff]
      %v74 = vld [vmem:[#allocation3 + $0x148] sm:$0xff]
      %v75 = vld [vmem:[#allocation3 + $0x150] sm:$0xff]
      %v76 = vld [vmem:[#allocation3 + $0x158] sm:$0xff]
      %v77 = vld [vmem:[#allocation3 + $0x160] sm:$0xff]
      %v78 = vld [vmem:[#allocation3 + $0x168] sm:$0xff]
      %v79 = vld [vmem:[#allocation3 + $0x170] sm:$0xff]
      %v80 = vld [vmem:[#allocation3 + $0x178] sm:$0xff]
      %v81 = vld [vmem:[#allocation3 + $0x180] sm:$0xff]
      %v82 = vld [vmem:[#allocation3 + $0x188] sm:$0xff]
      %v83 = vld [vmem:[#allocation3 + $0x190] sm:$0xff]
      %v84 = vld [vmem:[#allocation3 + $0x198] sm:$0xff]
      %v85 = vld [vmem:[#allocation3 + $0x1a0] sm:$0xff]
      %v86 = vld [vmem:[#allocation3 + $0x1a8] sm:$0xff]
      %v87 = vld [vmem:[#allocation3 + $0x1b0] sm:$0xff]
      %v88 = vld [vmem:[#allocation3 + $0x1b8] sm:$0xff]
      %v89 = vld [vmem:[#allocation3 + $0x1c0] sm:$0xff]
      %v90 = vld [vmem:[#allocation3 + $0x1c8] sm:$0xff]
      %v91 = vld [vmem:[#allocation3 + $0x1d0] sm:$0xff]
      %v92 = vld [vmem:[#allocation3 + $0x1d8] sm:$0xff]
      %v93 = vld [vmem:[#allocation3 + $0x1e0] sm:$0xff]
      %v94 = vld [vmem:[#allocation3 + $0x1e8] sm:$0xff]
      %v95 = vld [vmem:[#allocation3 + $0x1f0] sm:$0xff]
      %v96 = vld [vmem:[#allocation3 + $0x1f8] sm:$0xff]
      %v97 = vmul.f32 %v33, %v33
      %v98 = vmul.f32 %v34, %v34
      %v99 = vmul.f32 %v35, %v35
      %v100 = vmul.f32 %v36, %v36
      %v101 = vmul.f32 %v37, %v37
      %v102 = vmul.f32 %v38, %v38
      %v103 = vmul.f32 %v39, %v39
      %v104 = vmul.f32 %v40, %v40
      %v105 = vmul.f32 %v41, %v41
      %v106 = vmul.f32 %v42, %v42
      %v107 = vmul.f32 %v43, %v43
      %v108 = vmul.f32 %v44, %v44
      %v109 = vmul.f32 %v45, %v45
      %v110 = vmul.f32 %v46, %v46
      %v111 = vmul.f32 %v47, %v47
      %v112 = vmul.f32 %v48, %v48
      %v113 = vmul.f32 %v49, %v49
      %v114 = vmul.f32 %v50, %v50
      %v115 = vmul.f32 %v51, %v51
      %v116 = vmul.f32 %v52, %v52
      %v117 = vmul.f32 %v53, %v53
      %v118 = vmul.f32 %v54, %v54
      %v119 = vmul.f32 %v55, %v55
      %v120 = vmul.f32 %v56, %v56
      %v121 = vmul.f32 %v57, %v57
      %v122 = vmul.f32 %v58, %v58
      %v123 = vmul.f32 %v59, %v59
      %v124 = vmul.f32 %v60, %v60
      %v125 = vmul.f32 %v61, %v61
      %v126 = vmul.f32 %v62, %v62
      %v127 = vmul.f32 %v63, %v63
      %v128 = vmul.f32 %v64, %v64
      %v129 = vmul.f32 %v65, %v65
      %v130 = vmul.f32 %v66, %v66
      %v131 = vmul.f32 %v67, %v67
      %v132 = vmul.f32 %v68, %v68
      %v133 = vmul.f32 %v69, %v69
      %v134 = vmul.f32 %v70, %v70
      %v135 = vmul.f32 %v71, %v71
      %v136 = vmul.f32 %v72, %v72
      %v137 = vmul.f32 %v73, %v73
      %v138 = vmul.f32 %v74, %v74
      %v139 = vmul.f32 %v75, %v75
      %v140 = vmul.f32 %v76, %v76
      %v141 = vmul.f32 %v77, %v77
      %v142 = vmul.f32 %v78, %v78
      %v143 = vmul.f32 %v79, %v79
      %v144 = vmul.f32 %v80, %v80
      %v145 = vmul.f32 %v81, %v81
      %v146 = vmul.f32 %v82, %v82
      %v147 = vmul.f32 %v83, %v83
      %v148 = vmul.f32 %v84, %v84
      %v149 = vmul.f32 %v85, %v85
      %v150 = vmul.f32 %v86, %v86
      %v151 = vmul.f32 %v87, %v87
      %v152 = vmul.f32 %v88, %v88
      %v153 = vmul.f32 %v89, %v89
      %v154 = vmul.f32 %v90, %v90
      %v155 = vmul.f32 %v91, %v91
      %v156 = vmul.f32 %v92, %v92
      %v157 = vmul.f32 %v93, %v93
      %v158 = vmul.f32 %v94, %v94
      %v159 = vmul.f32 %v95, %v95
      %v160 = vmul.f32 %v96, %v96
      %v161 = vadd.f32 %v97, %v105
      %v162 = vadd.f32 %v161, %v113
      %v163 = vadd.f32 %v162, %v121
      %v164 = vadd.f32 %v163, %v129
      %v165 = vadd.f32 %v164, %v137
      %v166 = vadd.f32 %v165, %v145
      %v167 = vadd.f32 %v166, %v153
      %v168 = vrot.slane %v167, 4
      %v169 = vadd.f32 %v167, %v168
      %v170 = vrot.slane %v169, 2
      %v171 = vadd.f32 %v169, %v170
      %v172 = vrot.slane %v171, 1
      %v173 = vadd.f32 %v171, %v172
      %v174 = vadd.f32 %v98, %v106
      %v175 = vadd.f32 %v174, %v114
      %v176 = vadd.f32 %v175, %v122
      %v177 = vadd.f32 %v176, %v130
      %v178 = vadd.f32 %v177, %v138
      %v179 = vadd.f32 %v178, %v146
      %v180 = vadd.f32 %v179, %v154
      %v181 = vrot.slane %v180, 4
      %v182 = vadd.f32 %v180, %v181
      %v183 = vrot.slane %v182, 2
      %v184 = vadd.f32 %v182, %v183
      %v185 = vrot.slane %v184, 1
      %v186 = vadd.f32 %v184, %v185
      %v187 = vadd.f32 %v99, %v107
      %v188 = vadd.f32 %v187, %v115
      %v189 = vadd.f32 %v188, %v123
      %v190 = vadd.f32 %v189, %v131
      %v191 = vadd.f32 %v190, %v139
      %v192 = vadd.f32 %v191, %v147
      %v193 = vadd.f32 %v192, %v155
      %v194 = vrot.slane %v193, 4
      %v195 = vadd.f32 %v193, %v194
      %v196 = vrot.slane %v195, 2
      %v197 = vadd.f32 %v195, %v196
      %v198 = vrot.slane %v197, 1
      %v199 = vadd.f32 %v197, %v198
      %v200 = vadd.f32 %v100, %v108
      %v201 = vadd.f32 %v200, %v116
      %v202 = vadd.f32 %v201, %v124
      %v203 = vadd.f32 %v202, %v132
      %v204 = vadd.f32 %v203, %v140
      %v205 = vadd.f32 %v204, %v148
      %v206 = vadd.f32 %v205, %v156
      %v207 = vrot.slane %v206, 4
      %v208 = vadd.f32 %v206, %v207
      %v209 = vrot.slane %v208, 2
      %v210 = vadd.f32 %v208, %v209
      %v211 = vrot.slane %v210, 1
      %v212 = vadd.f32 %v210, %v211
      %v213 = vadd.f32 %v101, %v109
      %v214 = vadd.f32 %v213, %v117
      %v215 = vadd.f32 %v214, %v125
      %v216 = vadd.f32 %v215, %v133
      %v217 = vadd.f32 %v216, %v141
      %v218 = vadd.f32 %v217, %v149
      %v219 = vadd.f32 %v218, %v157
      %v220 = vrot.slane %v219, 4
      %v221 = vadd.f32 %v219, %v220
      %v222 = vrot.slane %v221, 2
      %v223 = vadd.f32 %v221, %v222
      %v224 = vrot.slane %v223, 1
      %v225 = vadd.f32 %v223, %v224
      %v226 = vadd.f32 %v102, %v110
      %v227 = vadd.f32 %v226, %v118
      %v228 = vadd.f32 %v227, %v126
      %v229 = vadd.f32 %v228, %v134
      %v230 = vadd.f32 %v229, %v142
      %v231 = vadd.f32 %v230, %v150
      %v232 = vadd.f32 %v231, %v158
      %v233 = vrot.slane %v232, 4
      %v234 = vadd.f32 %v232, %v233
      %v235 = vrot.slane %v234, 2
      %v236 = vadd.f32 %v234, %v235
      %v237 = vrot.slane %v236, 1
      %v238 = vadd.f32 %v236, %v237
      %v239 = vadd.f32 %v103, %v111
      %v240 = vadd.f32 %v239, %v119
      %v241 = vadd.f32 %v240, %v127
      %v242 = vadd.f32 %v241, %v135
      %v243 = vadd.f32 %v242, %v143
      %v244 = vadd.f32 %v243, %v151
      %v245 = vadd.f32 %v244, %v159
      %v246 = vrot.slane %v245, 4
      %v247 = vadd.f32 %v245, %v246
      %v248 = vrot.slane %v247, 2
      %v249 = vadd.f32 %v247, %v248
      %v250 = vrot.slane %v249, 1
      %v251 = vadd.f32 %v249, %v250
      %v252 = vadd.f32 %v104, %v112
      %v253 = vadd.f32 %v252, %v120
      %v254 = vadd.f32 %v253, %v128
      %v255 = vadd.f32 %v254, %v136
      %v256 = vadd.f32 %v255, %v144
      %v257 = vadd.f32 %v256, %v152
      %v258 = vadd.f32 %v257, %v160
      %v259 = vrot.slane %v258, 4
      %v260 = vadd.f32 %v258, %v259
      %v261 = vrot.slane %v260, 2
      %v262 = vadd.f32 %v260, %v261
      %v263 = vrot.slane %v262, 1
      %v264 = vadd.f32 %v262, %v263
      %v265 = vmax.f32 %v173, 1e-24
      %v266 = vmax.f32 %v186, 1e-24
      %v267 = vmax.f32 %v199, 1e-24
      %v268 = vmax.f32 %v212, 1e-24
      %v269 = vmax.f32 %v225, 1e-24
      %v270 = vmax.f32 %v238, 1e-24
      %v271 = vmax.f32 %v251, 1e-24
      %v272 = vmax.f32 %v264, 1e-24
      %v273 = vrsqrt.pop %v265
      %v274 = vrsqrt.pop %v266
      %v275 = vrsqrt.pop %v267
      %v276 = vrsqrt.pop %v268
      %v277 = vrsqrt.pop %v269
      %v278 = vrsqrt.pop %v270
      %v279 = vrsqrt.pop %v271
      %v280 = vrsqrt.pop %v272
      %v281 = vmul.f32 %v33, %v273
      %v282 = vmul.f32 %v34, %v274
      %v283 = vmul.f32 %v35, %v275
      %v284 = vmul.f32 %v36, %v276
      %v285 = vmul.f32 %v37, %v277
      %v286 = vmul.f32 %v38, %v278
      %v287 = vmul.f32 %v39, %v279
      %v288 = vmul.f32 %v40, %v280
      %v289 = vmul.f32 %v41, %v273
      %v290 = vmul.f32 %v42, %v274
      %v291 = vmul.f32 %v43, %v275
      %v292 = vmul.f32 %v44, %v276
      %v293 = vmul.f32 %v45, %v277
      %v294 = vmul.f32 %v46, %v278
      %v295 = vmul.f32 %v47, %v279
      %v296 = vmul.f32 %v48, %v280
      %v297 = vmul.f32 %v49, %v273
      %v298 = vmul.f32 %v50, %v274
      %v299 = vmul.f32 %v51, %v275
      %v300 = vmul.f32 %v52, %v276
      %v301 = vmul.f32 %v53, %v277
      %v302 = vmul.f32 %v54, %v278
      %v303 = vmul.f32 %v55, %v279
      %v304 = vmul.f32 %v56, %v280
      %v305 = vmul.f32 %v57, %v273
      %v306 = vmul.f32 %v58, %v274
      %v307 = vmul.f32 %v59, %v275
      %v308 = vmul.f32 %v60, %v276
      %v309 = vmul.f32 %v61, %v277
      %v310 = vmul.f32 %v62, %v278
      %v311 = vmul.f32 %v63, %v279
      %v312 = vmul.f32 %v64, %v280
      %v313 = vmul.f32 %v65, %v273
      %v314 = vmul.f32 %v66, %v274
      %v315 = vmul.f32 %v67, %v275
      %v316 = vmul.f32 %v68, %v276
      %v317 = vmul.f32 %v69, %v277
      %v318 = vmul.f32 %v70, %v278
      %v319 = vmul.f32 %v71, %v279
      %v320 = vmul.f32 %v72, %v280
      %v321 = vmul.f32 %v73, %v273
      %v322 = vmul.f32 %v74, %v274
      %v323 = vmul.f32 %v75, %v275
      %v324 = vmul.f32 %v76, %v276
      %v325 = vmul.f32 %v77, %v277
      %v326 = vmul.f32 %v78, %v278
      %v327 = vmul.f32 %v79, %v279
      %v328 = vmul.f32 %v80, %v280
      %v329 = vmul.f32 %v81, %v273
      %v330 = vmul.f32 %v82, %v274
      %v331 = vmul.f32 %v83, %v275
      %v332 = vmul.f32 %v84, %v276
      %v333 = vmul.f32 %v85, %v277
      %v334 = vmul.f32 %v86, %v278
      %v335 = vmul.f32 %v87, %v279
      %v336 = vmul.f32 %v88, %v280
      %v337 = vmul.f32 %v89, %v273
      %v338 = vmul.f32 %v90, %v274
      %v339 = vmul.f32 %v91, %v275
      %v340 = vmul.f32 %v92, %v276
      %v341 = vmul.f32 %v93, %v277
      %v342 = vmul.f32 %v94, %v278
      %v343 = vmul.f32 %v95, %v279
      %v344 = vmul.f32 %v96, %v280
      %345 = vst [vmem:[#allocation2] sm:$0xff] %v281
      %346 = vst [vmem:[#allocation2 + $0x8] sm:$0xff] %v282
      %347 = vst [vmem:[#allocation2 + $0x10] sm:$0xff] %v283
      %348 = vst [vmem:[#allocation2 + $0x18] sm:$0xff] %v284
      %349 = vst [vmem:[#allocation2 + $0x20] sm:$0xff] %v285
      %350 = vst [vmem:[#allocation2 + $0x28] sm:$0xff] %v286
      %351 = vst [vmem:[#allocation2 + $0x30] sm:$0xff] %v287
      %352 = vst [vmem:[#allocation2 + $0x38] sm:$0xff] %v288
      %353 = vst [vmem:[#allocation2 + $0x40] sm:$0xff] %v289
      %354 = vst [vmem:[#allocation2 + $0x48] sm:$0xff] %v290
      %355 = vst [vmem:[#allocation2 + $0x50] sm:$0xff] %v291
      %356 = vst [vmem:[#allocation2 + $0x58] sm:$0xff] %v292
      %357 = vst [vmem:[#allocation2 + $0x60] sm:$0xff] %v293
      %358 = vst [vmem:[#allocation2 + $0x68] sm:$0xff] %v294
      %359 = vst [vmem:[#allocation2 + $0x70] sm:$0xff] %v295
      %360 = vst [vmem:[#allocation2 + $0x78] sm:$0xff] %v296
      %361 = vst [vmem:[#allocation2 + $0x80] sm:$0xff] %v297
      %362 = vst [vmem:[#allocation2 + $0x88] sm:$0xff] %v298
      %363 = vst [vmem:[#allocation2 + $0x90] sm:$0xff] %v299
      %364 = vst [vmem:[#allocation2 + $0x98] sm:$0xff] %v300
      %365 = vst [vmem:[#allocation2 + $0xa0] sm:$0xff] %v301
      %366 = vst [vmem:[#allocation2 + $0xa8] sm:$0xff] %v302
      %367 = vst [vmem:[#allocation2 + $0xb0] sm:$0xff] %v303
      %368 = vst [vmem:[#allocation2 + $0xb8] sm:$0xff] %v304
      %369 = vst [vmem:[#allocation2 + $0xc0] sm:$0xff] %v305
      %370 = vst [vmem:[#allocation2 + $0xc8] sm:$0xff] %v306
      %371 = vst [vmem:[#allocation2 + $0xd0] sm:$0xff] %v307
      %372 = vst [vmem:[#allocation2 + $0xd8] sm:$0xff] %v308
      %373 = vst [vmem:[#allocation2 + $0xe0] sm:$0xff] %v309
      %374 = vst [vmem:[#allocation2 + $0xe8] sm:$0xff] %v310
      %375 = vst [vmem:[#allocation2 + $0xf0] sm:$0xff] %v311
      %376 = vst [vmem:[#allocation2 + $0xf8] sm:$0xff] %v312
      %377 = vst [vmem:[#allocation2 + $0x100] sm:$0xff] %v313
      %378 = vst [vmem:[#allocation2 + $0x108] sm:$0xff] %v314
      %379 = vst [vmem:[#allocation2 + $0x110] sm:$0xff] %v315
      %380 = vst [vmem:[#allocation2 + $0x118] sm:$0xff] %v316
      %381 = vst [vmem:[#allocation2 + $0x120] sm:$0xff] %v317
      %382 = vst [vmem:[#allocation2 + $0x128] sm:$0xff] %v318
      %383 = vst [vmem:[#allocation2 + $0x130] sm:$0xff] %v319
      %384 = vst [vmem:[#allocation2 + $0x138] sm:$0xff] %v320
      %385 = vst [vmem:[#allocation2 + $0x140] sm:$0xff] %v321
      %386 = vst [vmem:[#allocation2 + $0x148] sm:$0xff] %v322
      %387 = vst [vmem:[#allocation2 + $0x150] sm:$0xff] %v323
      %388 = vst [vmem:[#allocation2 + $0x158] sm:$0xff] %v324
      %389 = vst [vmem:[#allocation2 + $0x160] sm:$0xff] %v325
      %390 = vst [vmem:[#allocation2 + $0x168] sm:$0xff] %v326
      %391 = vst [vmem:[#allocation2 + $0x170] sm:$0xff] %v327
      %392 = vst [vmem:[#allocation2 + $0x178] sm:$0xff] %v328
      %393 = vst [vmem:[#allocation2 + $0x180] sm:$0xff] %v329
      %394 = vst [vmem:[#allocation2 + $0x188] sm:$0xff] %v330
      %395 = vst [vmem:[#allocation2 + $0x190] sm:$0xff] %v331
      %396 = vst [vmem:[#allocation2 + $0x198] sm:$0xff] %v332
      %397 = vst [vmem:[#allocation2 + $0x1a0] sm:$0xff] %v333
      %398 = vst [vmem:[#allocation2 + $0x1a8] sm:$0xff] %v334
      %399 = vst [vmem:[#allocation2 + $0x1b0] sm:$0xff] %v335
      %400 = vst [vmem:[#allocation2 + $0x1b8] sm:$0xff] %v336
      %401 = vst [vmem:[#allocation2 + $0x1c0] sm:$0xff] %v337
      %402 = vst [vmem:[#allocation2 + $0x1c8] sm:$0xff] %v338
      %403 = vst [vmem:[#allocation2 + $0x1d0] sm:$0xff] %v339
      %404 = vst [vmem:[#allocation2 + $0x1d8] sm:$0xff] %v340
      %405 = vst [vmem:[#allocation2 + $0x1e0] sm:$0xff] %v341
      %406 = vst [vmem:[#allocation2 + $0x1e8] sm:$0xff] %v342
      %407 = vst [vmem:[#allocation2 + $0x1f0] sm:$0xff] %v343
      %408 = vst [vmem:[#allocation2 + $0x1f8] sm:$0xff] %v344
    $region21: #{tpu_custom_call.1} parent=1 // pred_fallthru
      _
    %v409 = vld [vmem:[%s0] sm:$0xff]
    %v410 = vld [vmem:[%s0 + $0x8] sm:$0xff]
    %v411 = vld [vmem:[#allocation2] sm:$0xff]
    %v412 = vld [vmem:[#allocation2 + $0x8] sm:$0xff]
    %v413 = vld [vmem:[#allocation2 + $0x10] sm:$0xff]
    %v414 = vld [vmem:[#allocation2 + $0x18] sm:$0xff]
    %v415 = vld [vmem:[#allocation2 + $0x20] sm:$0xff]
    %v416 = vld [vmem:[#allocation2 + $0x28] sm:$0xff]
    %v417 = vld [vmem:[#allocation2 + $0x30] sm:$0xff]
    %v418 = vld [vmem:[#allocation2 + $0x38] sm:$0xff]
    %v419 = vld [vmem:[#allocation2 + $0x40] sm:$0xff]
    %v420 = vld [vmem:[#allocation2 + $0x48] sm:$0xff]
    %v421 = vld [vmem:[#allocation2 + $0x50] sm:$0xff]
    %v422 = vld [vmem:[#allocation2 + $0x58] sm:$0xff]
    %v423 = vld [vmem:[#allocation2 + $0x60] sm:$0xff]
    %v424 = vld [vmem:[#allocation2 + $0x68] sm:$0xff]
    %v425 = vld [vmem:[#allocation2 + $0x70] sm:$0xff]
    %v426 = vld [vmem:[#allocation2 + $0x78] sm:$0xff]
    %v427 = vld [vmem:[#allocation2 + $0x80] sm:$0xff]
    %v428 = vld [vmem:[#allocation2 + $0x88] sm:$0xff]
    %v429 = vld [vmem:[#allocation2 + $0x90] sm:$0xff]
    %v430 = vld [vmem:[#allocation2 + $0x98] sm:$0xff]
    %v431 = vld [vmem:[#allocation2 + $0xa0] sm:$0xff]
    %v432 = vld [vmem:[#allocation2 + $0xa8] sm:$0xff]
    %v433 = vld [vmem:[#allocation2 + $0xb0] sm:$0xff]
    %v434 = vld [vmem:[#allocation2 + $0xb8] sm:$0xff]
    %v435 = vld [vmem:[#allocation2 + $0xc0] sm:$0xff]
    %v436 = vld [vmem:[#allocation2 + $0xc8] sm:$0xff]
    %v437 = vld [vmem:[#allocation2 + $0xd0] sm:$0xff]
    %v438 = vld [vmem:[#allocation2 + $0xd8] sm:$0xff]
    %v439 = vld [vmem:[#allocation2 + $0xe0] sm:$0xff]
    %v440 = vld [vmem:[#allocation2 + $0xe8] sm:$0xff]
    %v441 = vld [vmem:[#allocation2 + $0xf0] sm:$0xff]
    %v442 = vld [vmem:[#allocation2 + $0xf8] sm:$0xff]
    %v443 = vld [vmem:[#allocation2 + $0x100] sm:$0xff]
    %v444 = vld [vmem:[#allocation2 + $0x108] sm:$0xff]
    %v445 = vld [vmem:[#allocation2 + $0x110] sm:$0xff]
    %v446 = vld [vmem:[#allocation2 + $0x118] sm:$0xff]
    %v447 = vld [vmem:[#allocation2 + $0x120] sm:$0xff]
    %v448 = vld [vmem:[#allocation2 + $0x128] sm:$0xff]
    %v449 = vld [vmem:[#allocation2 + $0x130] sm:$0xff]
    %v450 = vld [vmem:[#allocation2 + $0x138] sm:$0xff]
    %v451 = vld [vmem:[#allocation2 + $0x140] sm:$0xff]
    %v452 = vld [vmem:[#allocation2 + $0x148] sm:$0xff]
    %v453 = vld [vmem:[#allocation2 + $0x150] sm:$0xff]
    %v454 = vld [vmem:[#allocation2 + $0x158] sm:$0xff]
    %v455 = vld [vmem:[#allocation2 + $0x160] sm:$0xff]
    %v456 = vld [vmem:[#allocation2 + $0x168] sm:$0xff]
    %v457 = vld [vmem:[#allocation2 + $0x170] sm:$0xff]
    %v458 = vld [vmem:[#allocation2 + $0x178] sm:$0xff]
    %v459 = vld [vmem:[#allocation2 + $0x180] sm:$0xff]
    %v460 = vld [vmem:[#allocation2 + $0x188] sm:$0xff]
    %v461 = vld [vmem:[#allocation2 + $0x190] sm:$0xff]
    %v462 = vld [vmem:[#allocation2 + $0x198] sm:$0xff]
    %v463 = vld [vmem:[#allocation2 + $0x1a0] sm:$0xff]
    %v464 = vld [vmem:[#allocation2 + $0x1a8] sm:$0xff]
    %v465 = vld [vmem:[#allocation2 + $0x1b0] sm:$0xff]
    %v466 = vld [vmem:[#allocation2 + $0x1b8] sm:$0xff]
    %v467 = vld [vmem:[#allocation2 + $0x1c0] sm:$0xff]
    %v468 = vld [vmem:[#allocation2 + $0x1c8] sm:$0xff]
    %v469 = vld [vmem:[#allocation2 + $0x1d0] sm:$0xff]
    %v470 = vld [vmem:[#allocation2 + $0x1d8] sm:$0xff]
    %v471 = vld [vmem:[#allocation2 + $0x1e0] sm:$0xff]
    %v472 = vld [vmem:[#allocation2 + $0x1e8] sm:$0xff]
    %v473 = vld [vmem:[#allocation2 + $0x1f0] sm:$0xff]
    %v474 = vld [vmem:[#allocation2 + $0x1f8] sm:$0xff]
    %vm475 = vcmask 523264
    %v477 = vsel %vm475, %v409, 0
    %v480 = vsel %vm475, %v410, 0
    %482 = vmatprep.subr.mxu0 %v412
    %483 = vmatpush1.msra.mxu0 %v411
    %484 = vmatprep.subr.mxu0 %v420
    %485 = vmatpush1.msra.mxu0 %v419
    %486 = vmatprep.subr.mxu0 %v428
    %487 = vmatpush1.msra.mxu0 %v427
    %488 = vmatprep.subr.mxu0 %v436
    %489 = vmatpush1.msra.mxu0 %v435
    %490 = vmatprep.subr.mxu0 %v444
    %491 = vmatpush1.msra.mxu0 %v443
    %492 = vmatprep.subr.mxu0 %v452
    %493 = vmatpush1.msra.mxu0 %v451
    %494 = vmatprep.subr.mxu0 %v460
    %495 = vmatpush1.msra.mxu0 %v459
    %496 = vmatprep.subr.mxu0 %v468
    %497 = vmatpush1.msra.mxu0 %v467
    %498 = vmatprep.subr.mxu0 0.0
    %499 = vmatpush1.msra.mxu0 0.0
    %500 = vmatprep.subr.mxu0 0.0
    %501 = vmatpush1.msra.mxu0 0.0
    %502 = vmatprep.subr.mxu0 0.0
    %503 = vmatpush1.msra.mxu0 0.0
    %504 = vmatprep.subr.mxu0 0.0
    %505 = vmatpush1.msra.mxu0 0.0
    %506 = vmatprep.subr.mxu0 0.0
    %507 = vmatpush1.msra.mxu0 0.0
    %508 = vmatprep.subr.mxu0 0.0
    %509 = vmatpush1.msra.mxu0 0.0
    %510 = vmatprep.subr.mxu0 0.0
    %511 = vmatpush1.msra.mxu0 0.0
    %512 = vmatprep.subr.mxu0 0.0
    %513 = vmatpush1.msra.mxu0 0.0
    %514 = vmatprep.subr.mxu0 0.0
    %515 = vmatpush1.msra.mxu0 0.0
    %516 = vmatprep.subr.mxu0 0.0
    %517 = vmatpush1.msra.mxu0 0.0
    %518 = vmatprep.subr.mxu0 0.0
    %519 = vmatpush1.msra.mxu0 0.0
    %520 = vmatprep.subr.mxu0 0.0
    %521 = vmatpush1.msra.mxu0 0.0
    %522 = vmatprep.subr.mxu0 0.0
    %523 = vmatpush1.msra.mxu0 0.0
    %524 = vmatprep.subr.mxu0 0.0
    %525 = vmatpush1.msra.mxu0 0.0
    %526 = vmatprep.subr.mxu0 0.0
    %527 = vmatpush1.msra.mxu0 0.0
    %528 = vmatprep.subr.mxu0 0.0
    %529 = vmatpush1.msra.mxu0 0.0
    %530 = vmatprep.subr.mxu0 0.0
    %531 = vmatpush1.msra.mxu0 0.0
    %532 = vmatprep.subr.mxu0 0.0
    %533 = vmatpush1.msra.mxu0 0.0
    %534 = vmatprep.subr.mxu0 0.0
    %535 = vmatpush1.msra.mxu0 0.0
    %536 = vmatprep.subr.mxu0 0.0
    %537 = vmatpush1.msra.mxu0 0.0
    %538 = vmatprep.subr.mxu0 0.0
    %539 = vmatpush1.msra.mxu0 0.0
    %540 = vmatprep.subr.mxu0 0.0
    %541 = vmatpush1.msra.mxu0 0.0
    %542 = vmatprep.subr.mxu0 0.0
    %543 = vmatpush1.msra.mxu0 0.0
    %544 = vmatprep.subr.mxu0 0.0
    %545 = vmatpush1.msra.mxu0 0.0
    %546 = vmatprep.mubr.f32.mxu0 0.0
    %547 = vmatmul.mubr.f32.gmra.mrb[0].mxu0 %v477
    %v548 = vpop.f32.mrb[0].mxu0
    %v549 = vadd.f32 0.0, %v548
    %v550 = vpop.f32.mrb[0].mxu0
    %v551 = vadd.f32 0.0, %v550
    %552 = vmatprep.mubr.f32.mxu0 0.0
    %553 = vmatmul.mubr.f32.gmra.mrb[0].mxu0 %v480
    %v554 = vpop.f32.mrb[0].mxu0
    %v555 = vadd.f32 0.0, %v554
    %v556 = vpop.f32.mrb[0].mxu0
    %v557 = vadd.f32 0.0, %v556
    %558 = vdwg.mxu0
    %559 = vmatprep.subr.mxu0 %v414
    %560 = vmatpush1.msra.mxu0 %v413
    %561 = vmatprep.subr.mxu0 %v422
    %562 = vmatpush1.msra.mxu0 %v421
    %563 = vmatprep.subr.mxu0 %v430
    %564 = vmatpush1.msra.mxu0 %v429
    %565 = vmatprep.subr.mxu0 %v438
    %566 = vmatpush1.msra.mxu0 %v437
    %567 = vmatprep.subr.mxu0 %v446
    %568 = vmatpush1.msra.mxu0 %v445
    %569 = vmatprep.subr.mxu0 %v454
    %570 = vmatpush1.msra.mxu0 %v453
    %571 = vmatprep.subr.mxu0 %v462
    %572 = vmatpush1.msra.mxu0 %v461
    %573 = vmatprep.subr.mxu0 %v470
    %574 = vmatpush1.msra.mxu0 %v469
    %575 = vmatprep.subr.mxu0 0.0
    %576 = vmatpush1.msra.mxu0 0.0
    %577 = vmatprep.subr.mxu0 0.0
    %578 = vmatpush1.msra.mxu0 0.0
    %579 = vmatprep.subr.mxu0 0.0
    %580 = vmatpush1.msra.mxu0 0.0
    %581 = vmatprep.subr.mxu0 0.0
    %582 = vmatpush1.msra.mxu0 0.0
    %583 = vmatprep.subr.mxu0 0.0
    %584 = vmatpush1.msra.mxu0 0.0
    %585 = vmatprep.subr.mxu0 0.0
    %586 = vmatpush1.msra.mxu0 0.0
    %587 = vmatprep.subr.mxu0 0.0
    %588 = vmatpush1.msra.mxu0 0.0
    %589 = vmatprep.subr.mxu0 0.0
    %590 = vmatpush1.msra.mxu0 0.0
    %591 = vmatprep.subr.mxu0 0.0
    %592 = vmatpush1.msra.mxu0 0.0
    %593 = vmatprep.subr.mxu0 0.0
    %594 = vmatpush1.msra.mxu0 0.0
    %595 = vmatprep.subr.mxu0 0.0
    %596 = vmatpush1.msra.mxu0 0.0
    %597 = vmatprep.subr.mxu0 0.0
    %598 = vmatpush1.msra.mxu0 0.0
    %599 = vmatprep.subr.mxu0 0.0
    %600 = vmatpush1.msra.mxu0 0.0
    %601 = vmatprep.subr.mxu0 0.0
    %602 = vmatpush1.msra.mxu0 0.0
    %603 = vmatprep.subr.mxu0 0.0
    %604 = vmatpush1.msra.mxu0 0.0
    %605 = vmatprep.subr.mxu0 0.0
    %606 = vmatpush1.msra.mxu0 0.0
    %607 = vmatprep.subr.mxu0 0.0
    %608 = vmatpush1.msra.mxu0 0.0
    %609 = vmatprep.subr.mxu0 0.0
    %610 = vmatpush1.msra.mxu0 0.0
    %611 = vmatprep.subr.mxu0 0.0
    %612 = vmatpush1.msra.mxu0 0.0
    %613 = vmatprep.subr.mxu0 0.0
    %614 = vmatpush1.msra.mxu0 0.0
    %615 = vmatprep.subr.mxu0 0.0
    %616 = vmatpush1.msra.mxu0 0.0
    %617 = vmatprep.subr.mxu0 0.0
    %618 = vmatpush1.msra.mxu0 0.0
    %619 = vmatprep.subr.mxu0 0.0
    %620 = vmatpush1.msra.mxu0 0.0
    %621 = vmatprep.subr.mxu0 0.0
    %622 = vmatpush1.msra.mxu0 0.0
    %623 = vmatprep.mubr.f32.mxu0 0.0
    %624 = vmatmul.mubr.f32.gmra.mrb[0].mxu0 %v477
    %v625 = vpop.f32.mrb[0].mxu0
    %v626 = vadd.f32 0.0, %v625
    %v627 = vpop.f32.mrb[0].mxu0
    %v628 = vadd.f32 0.0, %v627
    %629 = vmatprep.mubr.f32.mxu0 0.0
    %630 = vmatmul.mubr.f32.gmra.mrb[0].mxu0 %v480
    %v631 = vpop.f32.mrb[0].mxu0
    %v632 = vadd.f32 0.0, %v631
    %v633 = vpop.f32.mrb[0].mxu0
    %v634 = vadd.f32 0.0, %v633
    %635 = vdwg.mxu0
    %636 = vmatprep.subr.mxu0 %v416
    %637 = vmatpush1.msra.mxu0 %v415
    %638 = vmatprep.subr.mxu0 %v424
    %639 = vmatpush1.msra.mxu0 %v423
    %640 = vmatprep.subr.mxu0 %v432
    %641 = vmatpush1.msra.mxu0 %v431
    %642 = vmatprep.subr.mxu0 %v440
    %643 = vmatpush1.msra.mxu0 %v439
    %644 = vmatprep.subr.mxu0 %v448
    %645 = vmatpush1.msra.mxu0 %v447
    %646 = vmatprep.subr.mxu0 %v456
    %647 = vmatpush1.msra.mxu0 %v455
    %648 = vmatprep.subr.mxu0 %v464
    %649 = vmatpush1.msra.mxu0 %v463
    %650 = vmatprep.subr.mxu0 %v472
    %651 = vmatpush1.msra.mxu0 %v471
    %652 = vmatprep.subr.mxu0 0.0
    %653 = vmatpush1.msra.mxu0 0.0
    %654 = vmatprep.subr.mxu0 0.0
    %655 = vmatpush1.msra.mxu0 0.0
    %656 = vmatprep.subr.mxu0 0.0
    %657 = vmatpush1.msra.mxu0 0.0
    %658 = vmatprep.subr.mxu0 0.0
    %659 = vmatpush1.msra.mxu0 0.0
    %660 = vmatprep.subr.mxu0 0.0
    %661 = vmatpush1.msra.mxu0 0.0
    %662 = vmatprep.subr.mxu0 0.0
    %663 = vmatpush1.msra.mxu0 0.0
    %664 = vmatprep.subr.mxu0 0.0
    %665 = vmatpush1.msra.mxu0 0.0
    %666 = vmatprep.subr.mxu0 0.0
    %667 = vmatpush1.msra.mxu0 0.0
    %668 = vmatprep.subr.mxu0 0.0
    %669 = vmatpush1.msra.mxu0 0.0
    %670 = vmatprep.subr.mxu0 0.0
    %671 = vmatpush1.msra.mxu0 0.0
    %672 = vmatprep.subr.mxu0 0.0
    %673 = vmatpush1.msra.mxu0 0.0
    %674 = vmatprep.subr.mxu0 0.0
    %675 = vmatpush1.msra.mxu0 0.0
    %676 = vmatprep.subr.mxu0 0.0
    %677 = vmatpush1.msra.mxu0 0.0
    %678 = vmatprep.subr.mxu0 0.0
    %679 = vmatpush1.msra.mxu0 0.0
    %680 = vmatprep.subr.mxu0 0.0
    %681 = vmatpush1.msra.mxu0 0.0
    %682 = vmatprep.subr.mxu0 0.0
    %683 = vmatpush1.msra.mxu0 0.0
    %684 = vmatprep.subr.mxu0 0.0
    %685 = vmatpush1.msra.mxu0 0.0
    %686 = vmatprep.subr.mxu0 0.0
    %687 = vmatpush1.msra.mxu0 0.0
    %688 = vmatprep.subr.mxu0 0.0
    %689 = vmatpush1.msra.mxu0 0.0
    %690 = vmatprep.subr.mxu0 0.0
    %691 = vmatpush1.msra.mxu0 0.0
    %692 = vmatprep.subr.mxu0 0.0
    %693 = vmatpush1.msra.mxu0 0.0
    %694 = vmatprep.subr.mxu0 0.0
    %695 = vmatpush1.msra.mxu0 0.0
    %696 = vmatprep.subr.mxu0 0.0
    %697 = vmatpush1.msra.mxu0 0.0
    %698 = vmatprep.subr.mxu0 0.0
    %699 = vmatpush1.msra.mxu0 0.0
    %700 = vmatprep.mubr.f32.mxu0 0.0
    %701 = vmatmul.mubr.f32.gmra.mrb[0].mxu0 %v477
    %v702 = vpop.f32.mrb[0].mxu0
    %v703 = vadd.f32 0.0, %v702
    %v704 = vpop.f32.mrb[0].mxu0
    %v705 = vadd.f32 0.0, %v704
    %706 = vmatprep.mubr.f32.mxu0 0.0
    %707 = vmatmul.mubr.f32.gmra.mrb[0].mxu0 %v480
    %v708 = vpop.f32.mrb[0].mxu0
    %v709 = vadd.f32 0.0, %v708
    %v710 = vpop.f32.mrb[0].mxu0
    %v711 = vadd.f32 0.0, %v710
    %712 = vdwg.mxu0
    %713 = vmatprep.subr.mxu0 %v418
    %714 = vmatpush1.msra.mxu0 %v417
    %715 = vmatprep.subr.mxu0 %v426
    %716 = vmatpush1.msra.mxu0 %v425
    %717 = vmatprep.subr.mxu0 %v434
    %718 = vmatpush1.msra.mxu0 %v433
    %719 = vmatprep.subr.mxu0 %v442
    %720 = vmatpush1.msra.mxu0 %v441
    %721 = vmatprep.subr.mxu0 %v450
    %722 = vmatpush1.msra.mxu0 %v449
    %723 = vmatprep.subr.mxu0 %v458
    %724 = vmatpush1.msra.mxu0 %v457
    %725 = vmatprep.subr.mxu0 %v466
    %726 = vmatpush1.msra.mxu0 %v465
    %727 = vmatprep.subr.mxu0 %v474
    %728 = vmatpush1.msra.mxu0 %v473
    %729 = vmatprep.subr.mxu0 0.0
    %730 = vmatpush1.msra.mxu0 0.0
    %731 = vmatprep.subr.mxu0 0.0
    %732 = vmatpush1.msra.mxu0 0.0
    %733 = vmatprep.subr.mxu0 0.0
    %734 = vmatpush1.msra.mxu0 0.0
    %735 = vmatprep.subr.mxu0 0.0
    %736 = vmatpush1.msra.mxu0 0.0
    %737 = vmatprep.subr.mxu0 0.0
    %738 = vmatpush1.msra.mxu0 0.0
    %739 = vmatprep.subr.mxu0 0.0
    %740 = vmatpush1.msra.mxu0 0.0
    %741 = vmatprep.subr.mxu0 0.0
    %742 = vmatpush1.msra.mxu0 0.0
    %743 = vmatprep.subr.mxu0 0.0
    %744 = vmatpush1.msra.mxu0 0.0
    %745 = vmatprep.subr.mxu0 0.0
    %746 = vmatpush1.msra.mxu0 0.0
    %747 = vmatprep.subr.mxu0 0.0
    %748 = vmatpush1.msra.mxu0 0.0
    %749 = vmatprep.subr.mxu0 0.0
    %750 = vmatpush1.msra.mxu0 0.0
    %751 = vmatprep.subr.mxu0 0.0
    %752 = vmatpush1.msra.mxu0 0.0
    %753 = vmatprep.subr.mxu0 0.0
    %754 = vmatpush1.msra.mxu0 0.0
    %755 = vmatprep.subr.mxu0 0.0
    %756 = vmatpush1.msra.mxu0 0.0
    %757 = vmatprep.subr.mxu0 0.0
    %758 = vmatpush1.msra.mxu0 0.0
    %759 = vmatprep.subr.mxu0 0.0
    %760 = vmatpush1.msra.mxu0 0.0
    %761 = vmatprep.subr.mxu0 0.0
    %762 = vmatpush1.msra.mxu0 0.0
    %763 = vmatprep.subr.mxu0 0.0
    %764 = vmatpush1.msra.mxu0 0.0
    %765 = vmatprep.subr.mxu0 0.0
    %766 = vmatpush1.msra.mxu0 0.0
    %767 = vmatprep.subr.mxu0 0.0
    %768 = vmatpush1.msra.mxu0 0.0
    %769 = vmatprep.subr.mxu0 0.0
    %770 = vmatpush1.msra.mxu0 0.0
    %771 = vmatprep.subr.mxu0 0.0
    %772 = vmatpush1.msra.mxu0 0.0
    %773 = vmatprep.subr.mxu0 0.0
    %774 = vmatpush1.msra.mxu0 0.0
    %775 = vmatprep.subr.mxu0 0.0
    %776 = vmatpush1.msra.mxu0 0.0
    %777 = vmatprep.mubr.f32.mxu0 0.0
    %778 = vmatmul.mubr.f32.gmra.mrb[0].mxu0 %v477
    %v779 = vpop.f32.mrb[0].mxu0
    %v780 = vadd.f32 0.0, %v779
    %v781 = vpop.f32.mrb[0].mxu0
    %v782 = vadd.f32 0.0, %v781
    %783 = vmatprep.mubr.f32.mxu0 0.0
    %784 = vmatmul.mubr.f32.gmra.mrb[0].mxu0 %v480
    %v785 = vpop.f32.mrb[0].mxu0
    %v786 = vadd.f32 0.0, %v785
    %v787 = vpop.f32.mrb[0].mxu0
    %v788 = vadd.f32 0.0, %v787
    %789 = vdwg.mxu0
    %v790 = vld [vmem:[%s2] sm:$0xff]
    %v791 = vld [vmem:[%s2 + $0x8] sm:$0xff]
    %s792 = smul.u32 0, 1024
    %v793 = vstv %s792
    %v794 = vsub.s32 %v790, %v793
    %v795 = vsub.s32 %v791, %v793
    %v796 = vlaneseq
    %v797 = vand.u32 %v796, 127
    %v798 = vadd.s32 %v797, 128
    %v799 = vadd.s32 %v797, 256
    %v800 = vadd.s32 %v797, 384
    %v801 = vadd.s32 %v797, 512
    %v802 = vadd.s32 %v797, 640
    %v803 = vadd.s32 %v797, 768
    %v804 = vadd.s32 %v797, 896
    %805 = vset.pattern.permute.xlu0 0
    %806 = vperm.xlu0 %805, %v794
    %v807 = vpop.permute.xlu0 %806
    %808 = vset.pattern.permute.xlu0 0
    %809 = vperm.xlu0 %808, %v795
    %v810 = vpop.permute.xlu0 %809
    %vm811 = vcmp.eq.s32.totalorder %v807, %v797
    %vm812 = vcmp.eq.s32.totalorder %v807, %v798
    %vm813 = vcmp.eq.s32.totalorder %v807, %v799
    %vm814 = vcmp.eq.s32.totalorder %v807, %v800
    %vm815 = vcmp.eq.s32.totalorder %v807, %v801
    %vm816 = vcmp.eq.s32.totalorder %v807, %v802
    %vm817 = vcmp.eq.s32.totalorder %v807, %v803
    %vm818 = vcmp.eq.s32.totalorder %v807, %v804
    %vm819 = vcmp.eq.s32.totalorder %v810, %v797
    %vm820 = vcmp.eq.s32.totalorder %v810, %v798
    %vm821 = vcmp.eq.s32.totalorder %v810, %v799
    %vm822 = vcmp.eq.s32.totalorder %v810, %v800
    %vm823 = vcmp.eq.s32.totalorder %v810, %v801
    %vm824 = vcmp.eq.s32.totalorder %v810, %v802
    %vm825 = vcmp.eq.s32.totalorder %v810, %v803
    %vm826 = vcmp.eq.s32.totalorder %v810, %v804
    %v827 = vsub.f32 %v549, 0.4
    %v828 = vsub.f32 %v551, 0.4
    %v829 = vsub.f32 %v626, 0.4
    %v830 = vsub.f32 %v628, 0.4
    %v831 = vsub.f32 %v703, 0.4
    %v832 = vsub.f32 %v705, 0.4
    %v833 = vsub.f32 %v780, 0.4
    %v834 = vsub.f32 %v782, 0.4
    %v835 = vsub.f32 %v555, 0.4
    %v836 = vsub.f32 %v557, 0.4
    %v837 = vsub.f32 %v632, 0.4
    %v838 = vsub.f32 %v634, 0.4
    %v839 = vsub.f32 %v709, 0.4
    %v840 = vsub.f32 %v711, 0.4
    %v841 = vsub.f32 %v786, 0.4
    %v842 = vsub.f32 %v788, 0.4
    %v843 = vsel %vm811, %v827, %v549
    %v844 = vsel %vm812, %v828, %v551
    %v845 = vsel %vm813, %v829, %v626
    %v846 = vsel %vm814, %v830, %v628
    %v847 = vsel %vm815, %v831, %v703
    %v848 = vsel %vm816, %v832, %v705
    %v849 = vsel %vm817, %v833, %v780
    %v850 = vsel %vm818, %v834, %v782
    %v851 = vsel %vm819, %v835, %v555
    %v852 = vsel %vm820, %v836, %v557
    %v853 = vsel %vm821, %v837, %v632
    %v854 = vsel %vm822, %v838, %v634
    %v855 = vsel %vm823, %v839, %v709
    %v856 = vsel %vm824, %v840, %v711
    %v857 = vsel %vm825, %v841, %v786
    %v858 = vsel %vm826, %v842, %v788
    %v859 = vmul.f32 %v843, 32.0
    %v860 = vmul.f32 %v844, 32.0
    %v861 = vmul.f32 %v845, 32.0
    %v862 = vmul.f32 %v846, 32.0
    %v863 = vmul.f32 %v847, 32.0
    %v864 = vmul.f32 %v848, 32.0
    %v865 = vmul.f32 %v849, 32.0
    %v866 = vmul.f32 %v850, 32.0
    %v867 = vmul.f32 %v851, 32.0
    %v868 = vmul.f32 %v852, 32.0
    %v869 = vmul.f32 %v853, 32.0
    %v870 = vmul.f32 %v854, 32.0
    %v871 = vmul.f32 %v855, 32.0
    %v872 = vmul.f32 %v856, 32.0
    %v873 = vmul.f32 %v857, 32.0
    %v874 = vmul.f32 %v858, 32.0
    %875 = vst [vmem:[#allocation6] sm:$0xff] %v859
    %876 = vst [vmem:[#allocation6 + $0x8] sm:$0xff] %v860
    %877 = vst [vmem:[#allocation6 + $0x10] sm:$0xff] %v861
    %878 = vst [vmem:[#allocation6 + $0x18] sm:$0xff] %v862
    %879 = vst [vmem:[#allocation6 + $0x20] sm:$0xff] %v863
    %880 = vst [vmem:[#allocation6 + $0x28] sm:$0xff] %v864
    %881 = vst [vmem:[#allocation6 + $0x30] sm:$0xff] %v865
    %882 = vst [vmem:[#allocation6 + $0x38] sm:$0xff] %v866
    %883 = vst [vmem:[#allocation6 + $0x40] sm:$0xff] %v867
    %884 = vst [vmem:[#allocation6 + $0x48] sm:$0xff] %v868
    %885 = vst [vmem:[#allocation6 + $0x50] sm:$0xff] %v869
    %886 = vst [vmem:[#allocation6 + $0x58] sm:$0xff] %v870
    %887 = vst [vmem:[#allocation6 + $0x60] sm:$0xff] %v871
    %888 = vst [vmem:[#allocation6 + $0x68] sm:$0xff] %v872
    %889 = vst [vmem:[#allocation6 + $0x70] sm:$0xff] %v873
    %890 = vst [vmem:[#allocation6 + $0x78] sm:$0xff] %v874
    // Predicated region
    $region22: #{tpu_custom_call.1} parent=1 // pred_check
      _
    $region23: #{tpu_custom_call.1} parent=1 // pred_check_branch
      %892 = sbr.rel (0) target = $region25
    $region24: #{tpu_custom_call.1} parent=1 // pred_region
      %s894 = ssub.s32 2048, 2048
      %895 = vsyncadd [#allocation5], %s894
      %s896 = sshll.u32 [#allocation6], 4
      %s897 = int_to_ptr.vmem [resolvable:$true] %s896
      %902 = dma.vmem_to_hbm [thread:$0]  %s897, 2048, %s3, [#allocation5], 1024, 1024, 64
    $region25: #{tpu_custom_call.1} parent=1 // pred_fallthru
      _
    // Predicated region
    $region26: #{tpu_custom_call.1} parent=1 // pred_check
      _
    $region27: #{tpu_custom_call.1} parent=1 // pred_check_branch
      %904 = sbr.rel (0) target = $region29
    $region28: #{tpu_custom_call.1} parent=1 // pred_region
      %905 = dma.done [#allocation5], 2048
    $region29: #{tpu_custom_call.1} parent=1 // pred_fallthru
      _
    %906 = vsyncpa [#allocation4], 1
    %907 = vsyncpa [#allocation5], 1

</llo_original>
